<compile_context>
chip_gen: v7x
topology: tpu7x:2x2x1
jax: 0.10.0
libtpu: 0.0.40
codegen_flags: <defaults>
</compile_context>

<pallas_src>
import jax
import jax.numpy as jnp
from jax.experimental import pallas as pl
from jax.experimental.pallas import tpu as pltpu


# ---------------------------------------------------------------------------
# Backward Pallas kernel: grad_input = -alpha * grad_output
# ---------------------------------------------------------------------------
def _neg_scale_kernel(alpha_ref, g_ref, o_ref):
    # alpha lives in SMEM as float32 (scalar prefetch). Compute -alpha once.
    neg_alpha = -alpha_ref[0]
    # Single multiply; promote to f32 if grads are bf16, then cast back.
    o_ref[...] = (g_ref[...] * neg_alpha).astype(o_ref.dtype)


# ---------------------------------------------------------------------------
# Layout helpers
# ---------------------------------------------------------------------------
_LANES_WIDE = 1024   # lane-dense last dim (large multiple of 128 -> unmasked vst)
_BLOCK_ROWS = 512    # 512 x 1024 f32 block = 2 MiB (safe on v5e/v6e/v7x)


def _to_slab(flat):
    """Pad + reshape a flat array into a lane-dense (rows, lanes) slab.

    rows is rounded up to a multiple of 8 (sublanes) and lanes is a multiple
    of 128, so blocks always satisfy the (8, 128) tiling constraint and no
    masked partial loads/stores are generated.
    """
    total = flat.shape[0]
    lanes = _LANES_WIDE if total >= _LANES_WIDE else 128
    rows = -(-total // lanes)        # ceil(total / lanes)
    rows = -(-rows // 8) * 8         # round rows up to a multiple of 8
    padded = rows * lanes
    if padded != total:
        flat = jnp.pad(flat, (0, padded - total))
    return flat.reshape(rows, lanes)


def _neg_scale_pallas(g, alpha):
    """grad_input = -alpha * g, streamed through a tiled Pallas kernel."""
    orig_shape = g.shape
    orig_size = g.size

    slab = _to_slab(g.reshape(-1))
    rows, lanes = slab.shape
    block_rows = min(_BLOCK_ROWS, rows)
    grid = (pl.cdiv(rows, block_rows),)

    alpha_arr = jnp.asarray(alpha, dtype=jnp.float32).reshape((1,))

    out = pl.pallas_call(
        _neg_scale_kernel,
        out_shape=jax.ShapeDtypeStruct(slab.shape, slab.dtype),
        grid_spec=pltpu.PrefetchScalarGridSpec(
            num_scalar_prefetch=1,            # alpha -> SMEM, fp32
            grid=grid,
            in_specs=[pl.BlockSpec((block_rows, lanes), lambda i, a: (i, 0))],
            out_specs=pl.BlockSpec((block_rows, lanes), lambda i, a: (i, 0)),
        ),
        # Donate the grad_output slab (input index 1, after the scalar) to the
        # output: elementwise overwrite, cuts peak HBM footprint.
        input_output_aliases={1: 0},
        compiler_params=pltpu.CompilerParams(
            dimension_semantics=("parallel",),  # megacore shard on v7x
        ),
    )(alpha_arr, slab)

    if out.size != orig_size:            # strip the alignment padding
        out = out.reshape(-1)[:orig_size]
    return out.reshape(orig_shape)


# ---------------------------------------------------------------------------
# RevGrad with custom VJP (mirrors RevGrad_F.forward / .backward)
# ---------------------------------------------------------------------------
@jax.custom_vjp
def rev_grad(x, alpha):
    # Forward is a pure identity: no kernel, no HBM traffic.
    return x


def _rev_grad_fwd(x, alpha):
    # Residual: only alpha is needed for the backward pass (kept fp32).
    return x, jnp.asarray(alpha, dtype=jnp.float32)


def _rev_grad_bwd(alpha, g):
    grad_input = _neg_scale_pallas(g, alpha)
    return (grad_input, None)  # no gradient w.r.t. alpha


rev_grad.defvjp(_rev_grad_fwd, _rev_grad_bwd)


class RevGrad:
    """JAX/Pallas equivalent of the PyTorch RevGrad module."""

    def __init__(self, alpha=1.0):
        # Non-trainable scalar, like torch.tensor(alpha, requires_grad=False).
        self._alpha = jnp.float32(alpha)

    def __call__(self, x):
        return rev_grad(x, self._alpha)


# ---------------------------------------------------------------------------
# Demo / self-check
# ---------------------------------------------------------------------------
if __name__ == "__main__":
    key = jax.random.PRNGKey(0)
    x = jax.random.normal(key, (2, 4, 16, 16), dtype=jnp.float32)  # NCHW

    module = RevGrad(alpha=0.5)

    # Forward: exact identity (no kernel involved).
    y = jax.block_until_ready(module(x))
    assert y.shape == x.shape and y.dtype == x.dtype
    assert bool(jnp.allclose(y, x)), "forward is not identity"

    # Backward: d/dx sum(RevGrad(x)) == -alpha everywhere (Pallas kernel path).
    grad_x = jax.block_until_ready(
        jax.grad(lambda inp: jnp.sum(module(inp)))(x)
    )
    assert bool(jnp.allclose(grad_x, -0.5 * jnp.ones_like(x))), "backward grad mismatch"

    # Also exercise the padded fallback (size not divisible by 128).
    x2 = jax.random.normal(jax.random.PRNGKey(1), (3, 7, 5), dtype=jnp.float32)
    grad_x2 = jax.block_until_ready(
        jax.grad(lambda inp: jnp.sum(rev_grad(inp, jnp.float32(2.0))))(x2)
    )
    assert bool(jnp.allclose(grad_x2, -2.0 * jnp.ones_like(x2))), "padded-path grad mismatch"

    print("KERNEL_OK")
</pallas_src>

<mosaic_0001>
module attributes {stable_mosaic.version = 11 : i64} {
  func.func @_neg_scale_kernel(%arg0: i32, %arg1: memref<1xf32, #tpu.memory_space<smem>>, %arg2: memref<8x1024xf32, #tpu.memory_space<vmem>>, %arg3: memref<8x1024xf32, #tpu.memory_space<vmem>>) attributes {dimension_semantics = [#tpu.dimension_semantics<parallel>], iteration_bounds = array<i64: 1>, scalar_prefetch = 1 : i64, scratch_operands = 0 : i64, tpu.core_type = #tpu.core_type<tc>, window_params = [{transform_indices = @transform_0, window_bounds = array<i64: 8, 1024>}, {transform_indices = @transform_1, window_bounds = array<i64: 8, 1024>}]} {
    %c0 = arith.constant 0 : index
    %0 = memref.load %arg1[%c0] : memref<1xf32, #tpu.memory_space<smem>>
    %cst = arith.constant 0.000000e+00 : f32
    %1 = arith.subf %cst, %0 : f32
    %c0_0 = arith.constant 0 : index
    %c0_1 = arith.constant 0 : index
    %2 = vector.load %arg2[%c0_0, %c0_1] : memref<8x1024xf32, #tpu.memory_space<vmem>>, vector<8x1024xf32>
    %3 = vector.broadcast %1 : f32 to vector<8x1024xf32>
    %4 = arith.mulf %2, %3 : vector<8x1024xf32>
    %c0_2 = arith.constant 0 : index
    %c0_3 = arith.constant 0 : index
    %5 = vector.load %arg3[%c0_2, %c0_3] : memref<8x1024xf32, #tpu.memory_space<vmem>>, vector<8x1024xf32>
    tpu.vector_store %arg3[%c0_2, %c0_3], %4 {strides = array<i32>} : memref<8x1024xf32, #tpu.memory_space<vmem>>, vector<8x1024xf32>,
    return
  }
  func.func @transform_0(%arg0: i32, %arg1: memref<1xf32, #tpu.memory_space<smem>>) -> (i32, i32) {
    %c0_i32 = arith.constant 0 : i32
    %c0_i32_0 = arith.constant 0 : i32
    return %arg0, %c0_i32 : i32, i32
  }
  func.func @transform_1(%arg0: i32, %arg1: memref<1xf32, #tpu.memory_space<smem>>) -> (i32, i32) {
    %c0_i32 = arith.constant 0 : i32
    %c0_i32_0 = arith.constant 0 : i32
    return %arg0, %c0_i32 : i32, i32
  }
}

</mosaic_0001>

<llo_original>
// kernel: tpu_custom_call.1
$region0: #{tpu_custom_call.1}
  #allocation0 [shape = 'u32[]', space=smem, size = 0x4, offset = 0x4, fixed_abs, tag = 'smem constant byte address 0x4 - core index']
  #allocation1 [shape = 'u32[144,128]{1,0:T(1,128)}', space=vmem, size = 0x12000, scoped, tag = 'internal scratch']
  #allocation2 [shape = 's32[1]{0}', space=sflag, size = 0x4, scoped, tag = 'scoped memory for tpu_custom_call.1']
  #allocation3 [shape = 'f32[1]{0:T(128)S(6)}', space=smem, size = 0x200, scoped, tag = 'prefetched SMEM operand 0']
  %s0 = inlined_call_operand.<no memory space> [shape: f32[1], index: 0, kind: input, shape index: {}]
  %s1 = inlined_call_operand.hbm [shape: f32[8,1024], index: 1, kind: input, shape index: {}, may-alias: {1,2}]
  %s2 = inlined_call_operand.hbm [shape: f32[8,1024], index: 2, kind: output, shape index: {}, may-alias: {1,2}]
  %s3 = sld [smem:[#allocation0]]
  $region18: #{tpu_custom_call.1} parent=0
    _
  %s5 = ssub.s32 1, %s3
  %s6 = scalar_select 0, %s5, %s3
  %7 = sst [smem:[#allocation3]] %s0
  $region1: #{tpu_custom_call.1} parent=0
    #allocation4 [shape = 'u8[32768]{0}', space=vmem, size = 0x8000, scoped, tag = 'input window, operand 1, single buffered']
    #allocation5 [shape = 's32[1]{0}', space=sflag, size = 0x4, scoped, tag = 'scoped memory for tpu_custom_call.1']
    #allocation6 [shape = 's32[1]{0}', space=sflag, size = 0x4, scoped, tag = 'scoped memory for tpu_custom_call.1']
    #allocation7 [shape = 'u8[32768]{0}', space=vmem, size = 0x8000, scoped, tag = 'output window, operand 0, single buffered']
    %8 = vsyncpa [#allocation5], 0
    %9 = vsyncpa [#allocation6], 0
    // Predicated region
    $region2: #{tpu_custom_call.1} parent=1 // pred_check
      _
    $region3: #{tpu_custom_call.1} parent=1 // pred_check_branch
      %11 = sbr.rel (0) target = $region5
    $region4: #{tpu_custom_call.1} parent=1 // pred_region
      %s13 = ssub.s32 1024, 1024
      %14 = vsyncadd [#allocation5], %s13
      %s16 = sshll.u32 [#allocation4], 4
      %s17 = int_to_ptr.vmem [resolvable:$true] %s16
      %19 = dma.hbm_to_vmem [thread:$0]  %s1, 1024, %s17, [#allocation5]
    $region5: #{tpu_custom_call.1} parent=1 // pred_fallthru
      _
    // Predicated region
    $region6: #{tpu_custom_call.1} parent=1 // pred_check
      _
    $region7: #{tpu_custom_call.1} parent=1 // pred_check_branch
      %21 = sbr.rel (0) target = $region9
    $region8: #{tpu_custom_call.1} parent=1 // pred_region
      %22 = dma.done [#allocation5], 1024
    $region9: #{tpu_custom_call.1} parent=1 // pred_fallthru
      _
    %s23 = sld [smem:[#allocation3]]
    %s24 = ssub.f32 0.0, %s23
    %v25 = vld [vmem:[#allocation4] sm:$0xff]
    %v26 = vld [vmem:[#allocation4 + $0x8] sm:$0xff]
    %v27 = vld [vmem:[#allocation4 + $0x10] sm:$0xff]
    %v28 = vld [vmem:[#allocation4 + $0x18] sm:$0xff]
    %v29 = vld [vmem:[#allocation4 + $0x20] sm:$0xff]
    %v30 = vld [vmem:[#allocation4 + $0x28] sm:$0xff]
    %v31 = vld [vmem:[#allocation4 + $0x30] sm:$0xff]
    %v32 = vld [vmem:[#allocation4 + $0x38] sm:$0xff]
    %v33 = vstv %s24
    %v34 = vmul.f32 %v25, %v33
    %v35 = vmul.f32 %v26, %v33
    %v36 = vmul.f32 %v27, %v33
    %v37 = vmul.f32 %v28, %v33
    %v38 = vmul.f32 %v29, %v33
    %v39 = vmul.f32 %v30, %v33
    %v40 = vmul.f32 %v31, %v33
    %v41 = vmul.f32 %v32, %v33
    %42 = vst [vmem:[#allocation7] sm:$0xff] %v34
    %43 = vst [vmem:[#allocation7 + $0x8] sm:$0xff] %v35
    %44 = vst [vmem:[#allocation7 + $0x10] sm:$0xff] %v36
    %45 = vst [vmem:[#allocation7 + $0x18] sm:$0xff] %v37
    %46 = vst [vmem:[#allocation7 + $0x20] sm:$0xff] %v38
    %47 = vst [vmem:[#allocation7 + $0x28] sm:$0xff] %v39
    %48 = vst [vmem:[#allocation7 + $0x30] sm:$0xff] %v40
    %49 = vst [vmem:[#allocation7 + $0x38] sm:$0xff] %v41
    // Predicated region
    $region10: #{tpu_custom_call.1} parent=1 // pred_check
      _
    $region11: #{tpu_custom_call.1} parent=1 // pred_check_branch
      %51 = sbr.rel (0) target = $region13
    $region12: #{tpu_custom_call.1} parent=1 // pred_region
      %s53 = ssub.s32 1024, 1024
      %54 = vsyncadd [#allocation6], %s53
      %s56 = sshll.u32 [#allocation7], 4
      %s57 = int_to_ptr.vmem [resolvable:$true] %s56
      %59 = dma.vmem_to_hbm [thread:$0]  %s57, 1024, %s2, [#allocation6]
    $region13: #{tpu_custom_call.1} parent=1 // pred_fallthru
      _
    // Predicated region
    $region14: #{tpu_custom_call.1} parent=1 // pred_check
      _
    $region15: #{tpu_custom_call.1} parent=1 // pred_check_branch
      %61 = sbr.rel (0) target = $region17
    $region16: #{tpu_custom_call.1} parent=1 // pred_region
      %62 = dma.done [#allocation6], 1024
    $region17: #{tpu_custom_call.1} parent=1 // pred_fallthru
      _
    %63 = vsyncpa [#allocation5], 1
    %64 = vsyncpa [#allocation6], 1

</llo_original>
